<compile_context>
chip_gen: v7x
topology: tpu7x:2x2x1
jax: 0.10.0
libtpu: 0.0.40
codegen_flags: <defaults>
</compile_context>

<pallas_src>
import functools

import jax
import jax.numpy as jnp
from jax import lax
from jax.experimental import pallas as pl
from jax.experimental.pallas import tpu as pltpu


def _cdiv(a, b):
    return (a + b - 1) // b


def _round_up(x, m):
    return ((x + m - 1) // m) * m


def _score_kernel(tok_ref, w1_ref, hc_ref, w2_ref, o_ref, *, matmul_dtype, chunk):
    """One (TB, TC) tile of scores, processed in class-chunks.

    tok_ref: (TB, TC, H)  token-embedding tile, native dtype (cast in-kernel)
    w1_ref : (H, H)       token part of W1 (resident across the grid)
    hc_ref : (TB, H)      per-row  cat(hidden, context) @ W1[:2H] + b1, f32
    w2_ref : (1, H)       final projection as a row, f32
    o_ref  : (TB, TC)     f32 scores
    """
    tb, tc, hd = tok_ref.shape
    n_chunks = tc // chunk

    precision = (lax.Precision.HIGHEST
                 if jnp.dtype(matmul_dtype) == jnp.dtype(jnp.float32) else None)

    def process(c0):
        # Chunk of the class dim; cast on the fly (no extra HBM pass upstream).
        tok = tok_ref[:, pl.ds(c0, chunk), :].astype(matmul_dtype)
        tok2d = tok.reshape(tb * chunk, hd)
        # Linear(3H -> H), token half only; f32 accumulation on the MXU.
        h = jnp.dot(tok2d, w1_ref[...],
                    preferred_element_type=jnp.float32, precision=precision)
        # Add the precomputed (hidden, context) projection (+ bias) per row.
        h = h.reshape(tb, chunk, hd) + hc_ref[...][:, None, :]
        # LeakyReLU (negative_slope=0.01): max(x, 0.01x) -- 2 VALU ops/elem.
        h = jnp.maximum(h, 0.01 * h)
        # Linear(H -> 1, bias=False) as a VPU multiply + lane reduction; the
        # result lands lane-dense in the (TB, TC) output slab.
        o_ref[:, pl.ds(c0, chunk)] = jnp.sum(h * w2_ref[...], axis=-1)

    if n_chunks == 1:
        process(0)
    else:
        def body(i, carry):
            process(pl.multiple_of(i * chunk, chunk))
            return carry
        lax.fori_loop(0, n_chunks, body, None, unroll=True)


@functools.partial(jax.jit, static_argnames=("matmul_dtype",))
def score_model_forward(hidden, context, token_embeddings, w1, b1, w2,
                        *, matmul_dtype=jnp.bfloat16):
    """hidden: (B, H), context: (B, H), token_embeddings: (B, C, H).

    w1: (3H, H)  -- transpose of PyTorch nn.Linear(3H, H).weight
    b1: (H,)
    w2: (H, 1)   -- transpose of PyTorch nn.Linear(H, 1, bias=False).weight
    Returns: (B, C) float32 scores.
    """
    B, C, H = token_embeddings.shape

    # ---- split the first linear layer (tiny, plain JAX) ---------------------
    hc = jnp.concatenate([hidden, context], axis=-1).astype(jnp.float32)   # (B, 2H)
    w1_hc = w1[: 2 * H].astype(jnp.float32)                                # (2H, H)
    w1_tok = w1[2 * H:].astype(matmul_dtype)                               # (H, H)
    hc_proj = (jnp.dot(hc, w1_hc, precision=lax.Precision.HIGHEST)
               + b1.reshape(1, H).astype(jnp.float32))                     # (B, H)
    w2_row = w2.reshape(1, H).astype(jnp.float32)                          # (1, H)

    tok_bytes = jnp.dtype(token_embeddings.dtype).itemsize
    w1_bytes = jnp.dtype(matmul_dtype).itemsize

    # ---- VMEM budget (generation-aware, conservative fallback) --------------
    try:
        vmem_cap = int(pltpu.get_tpu_info().vmem_capacity_bytes)
    except Exception:
        vmem_cap = 64 * 1024 * 1024          # v7x physical VMEM per TC
    budget = min(vmem_cap // 2, 28 * 1024 * 1024)
    vmem_limit = int(min(vmem_cap * 3 // 4, 96 * 1024 * 1024))

    # ---- tile selection ------------------------------------------------------
    TB = B if B <= 8 else 8

    if C <= 512:
        cands = [C] + [c for c in (512, 256, 128) if c < C]
    else:
        cands = [512, 256, 128]

    TC = cands[-1]
    for cand in cands:
        ch = 256 if (cand > 256 and cand % 256 == 0) else cand
        need = (2 * TB * cand * H * tok_bytes      # double-buffered tok tile
                + TB * ch * H * 4                  # live f32 chunk intermediate
                + 2 * H * H * w1_bytes             # resident W1 buffers
                + 2 * TB * cand * 4                # double-buffered output tile
                + 2 * TB * H * 4 + 2 * H * 4)      # hc_proj, w2 buffers
        if need <= budget:
            TC = cand
            break

    # v7x megacore: avoid a single-step grid when there is work worth splitting.
    if _cdiv(B, TB) == 1 and _cdiv(C, TC) == 1 and C >= 256:
        TC = _round_up(_cdiv(C, 2), 128)

    CHUNK = 256 if (TC > 256 and TC % 256 == 0) else TC
    grid = (_cdiv(B, TB), _cdiv(C, TC))

    kernel = functools.partial(_score_kernel, matmul_dtype=matmul_dtype, chunk=CHUNK)

    flops = 2 * B * C * H * H + 4 * B * C * H
    bytes_accessed = (B * C * H * tok_bytes + B * C * 4
                      + H * H * w1_bytes + B * H * 4 + H * 4)

    return pl.pallas_call(
        kernel,
        out_shape=jax.ShapeDtypeStruct((B, C), jnp.float32),
        grid_spec=pltpu.PrefetchScalarGridSpec(
            num_scalar_prefetch=0,
            grid=grid,
            in_specs=[
                # token-embedding tile (native dtype), pipelined by BlockSpec
                pl.BlockSpec((TB, TC, H), lambda bi, ci: (bi, ci, 0)),
                # token part of W1 -- same block every step (stays resident)
                pl.BlockSpec((H, H), lambda bi, ci: (0, 0)),
                # per-row hc projection (+ bias)
                pl.BlockSpec((TB, H), lambda bi, ci: (bi, 0)),
                # final projection as a row
                pl.BlockSpec((1, H), lambda bi, ci: (0, 0)),
            ],
            out_specs=pl.BlockSpec((TB, TC), lambda bi, ci: (bi, ci)),
        ),
        compiler_params=pltpu.CompilerParams(
            dimension_semantics=("parallel", "parallel"),
            vmem_limit_bytes=vmem_limit,
        ),
        cost_estimate=pl.CostEstimate(flops=flops, transcendentals=0,
                                      bytes_accessed=bytes_accessed),
    )(token_embeddings, w1_tok, hc_proj, w2_row)


def _reference(hidden, context, token_embeddings, w1, b1, w2):
    B, C, H = token_embeddings.shape
    hc = jnp.concatenate([hidden, context], axis=-1)
    hc = jnp.broadcast_to(hc[:, None, :], (B, C, 2 * H))
    x = jnp.concatenate([hc, token_embeddings], axis=-1)
    h = jnp.dot(x, w1, precision=lax.Precision.HIGHEST) + b1
    h = jnp.where(h > 0, h, 0.01 * h)
    return jnp.dot(h, w2, precision=lax.Precision.HIGHEST)[..., 0]


if __name__ == "__main__":
    key = jax.random.PRNGKey(0)
    k_h, k_c, k_t, k_w1, k_b1, k_w2 = jax.random.split(key, 6)

    B, C, H = 2, 8, 32
    hidden = jax.random.normal(k_h, (B, H), dtype=jnp.float32)
    context = jax.random.normal(k_c, (B, H), dtype=jnp.float32)
    token_embeddings = jax.random.normal(k_t, (B, C, H), dtype=jnp.float32)

    # PyTorch-style uniform(-1/sqrt(fan_in), 1/sqrt(fan_in)) init.
    bound1 = 1.0 / jnp.sqrt(3.0 * H)
    w1 = jax.random.uniform(k_w1, (3 * H, H), minval=-bound1, maxval=bound1,
                            dtype=jnp.float32)
    b1 = jax.random.uniform(k_b1, (H,), minval=-bound1, maxval=bound1,
                            dtype=jnp.float32)
    bound2 = 1.0 / jnp.sqrt(1.0 * H)
    w2 = jax.random.uniform(k_w2, (H, 1), minval=-bound2, maxval=bound2,
                            dtype=jnp.float32)

    ref = _reference(hidden, context, token_embeddings, w1, b1, w2)

    # f32 MXU path (tight check; HIGHEST precision inside the kernel).
    out_f32 = jax.block_until_ready(score_model_forward(
        hidden, context, token_embeddings, w1, b1, w2, matmul_dtype=jnp.float32))
    assert out_f32.shape == (B, C)
    assert jnp.allclose(out_f32, ref, atol=5e-3, rtol=5e-3)

    # bf16 MXU path (production default; f32 accumulation).
    out_bf16 = jax.block_until_ready(score_model_forward(
        hidden, context, token_embeddings, w1, b1, w2))
    assert out_bf16.shape == (B, C)
    assert jnp.allclose(out_bf16, ref, atol=5e-2, rtol=5e-2)

    # Remainder path: batch not a multiple of the batch tile -> uneven boundary
    # block handled in-kernel by Pallas (no wrapper-side jnp.pad / astype).
    B2 = 9
    hidden2 = jax.random.normal(k_h, (B2, H), dtype=jnp.float32)
    context2 = jax.random.normal(k_c, (B2, H), dtype=jnp.float32)
    tok2 = jax.random.normal(k_t, (B2, C, H), dtype=jnp.float32)
    ref2 = _reference(hidden2, context2, tok2, w1, b1, w2)
    out2 = jax.block_until_ready(score_model_forward(
        hidden2, context2, tok2, w1, b1, w2))
    assert out2.shape == (B2, C)
    assert jnp.allclose(out2, ref2, atol=5e-2, rtol=5e-2)

    print("KERNEL_OK")
</pallas_src>

<mosaic_0001>
module attributes {stable_mosaic.version = 11 : i64} {
  func.func @_score_kernel(%arg0: i32, %arg1: i32, %arg2: memref<2x8x32xf32, #tpu.memory_space<vmem>>, %arg3: memref<32x32xf32, #tpu.memory_space<vmem>>, %arg4: memref<2x32xf32, #tpu.memory_space<vmem>>, %arg5: memref<1x32xf32, #tpu.memory_space<vmem>>, %arg6: memref<2x8xf32, #tpu.memory_space<vmem>>) attributes {dimension_semantics = [#tpu.dimension_semantics<parallel>, #tpu.dimension_semantics<parallel>], iteration_bounds = array<i64: 1, 1>, scalar_prefetch = 0 : i64, scratch_operands = 0 : i64, tpu.core_type = #tpu.core_type<tc>, window_params = [{transform_indices = @transform_0, window_bounds = array<i64: 2, 8, 32>}, {pipeline_mode = #tpu.pipeline_mode<synchronous>, transform_indices = @transform_1, window_bounds = array<i64: 32, 32>}, {transform_indices = @transform_2, window_bounds = array<i64: 2, 32>}, {pipeline_mode = #tpu.pipeline_mode<synchronous>, transform_indices = @transform_3, window_bounds = array<i64: 1, 32>}, {transform_indices = @transform_4, window_bounds = array<i64: 2, 8>}]} {
    %c0 = arith.constant 0 : index
    %c0_0 = arith.constant 0 : index
    %c0_1 = arith.constant 0 : index
    %0 = vector.load %arg2[%c0, %c0_0, %c0_1] : memref<2x8x32xf32, #tpu.memory_space<vmem>>, vector<2x8x32xf32>
    %1 = vector.shape_cast %0 : vector<2x8x32xf32> to vector<16x32xf32>
    %c0_2 = arith.constant 0 : index
    %c0_3 = arith.constant 0 : index
    %2 = vector.load %arg3[%c0_2, %c0_3] : memref<32x32xf32, #tpu.memory_space<vmem>>, vector<32x32xf32>
    %cst = arith.constant dense<0.000000e+00> : vector<16x32xf32>
    %3 = tpu.matmul %1, %2, %cst {dimension_numbers = #tpu.dot_dimension_numbers<[1], [0], [0], [1], [0, 0, 1, 1], [], []>, precision = #tpu.contract_precision<fp32>} : vector<16x32xf32>, vector<32x32xf32>, vector<16x32xf32> -> vector<16x32xf32>
    %4 = vector.shape_cast %3 : vector<16x32xf32> to vector<2x8x32xf32>
    %c0_4 = arith.constant 0 : index
    %c0_5 = arith.constant 0 : index
    %5 = vector.load %arg4[%c0_4, %c0_5] : memref<2x32xf32, #tpu.memory_space<vmem>>, vector<2x32xf32>
    %6 = vector.shape_cast %5 : vector<2x32xf32> to vector<2x1x32xf32>
    %7 = vector.broadcast %6 : vector<2x1x32xf32> to vector<2x8x32xf32>
    %8 = arith.addf %4, %7 : vector<2x8x32xf32>
    %cst_6 = arith.constant 0.00999999977 : f32
    %9 = vector.broadcast %cst_6 : f32 to vector<2x8x32xf32>
    %10 = arith.mulf %9, %8 : vector<2x8x32xf32>
    %11 = arith.maximumf %8, %10 : vector<2x8x32xf32>
    %c0_7 = arith.constant 0 : index
    %c0_8 = arith.constant 0 : index
    %12 = vector.load %arg5[%c0_7, %c0_8] : memref<1x32xf32, #tpu.memory_space<vmem>>, vector<1x32xf32>
    %13 = vector.shape_cast %12 : vector<1x32xf32> to vector<1x1x32xf32>
    %14 = vector.broadcast %13 : vector<1x1x32xf32> to vector<2x8x32xf32>
    %15 = arith.mulf %11, %14 : vector<2x8x32xf32>
    %cst_9 = arith.constant dense<0.000000e+00> : vector<2x8xf32>
    %16 = vector.multi_reduction <add>, %15, %cst_9 [2] : vector<2x8x32xf32> to vector<2x8xf32>
    %c0_10 = arith.constant 0 : index
    %c0_11 = arith.constant 0 : index
    %17 = vector.load %arg6[%c0_10, %c0_11] : memref<2x8xf32, #tpu.memory_space<vmem>>, vector<2x8xf32>
    tpu.vector_store %arg6[%c0_10, %c0_11], %16 {strides = array<i32>} : memref<2x8xf32, #tpu.memory_space<vmem>>, vector<2x8xf32>,
    return
  }
  func.func @transform_0(%arg0: i32, %arg1: i32) -> (i32, i32, i32) {
    %c0_i32 = arith.constant 0 : i32
    %c0_i32_0 = arith.constant 0 : i32
    return %arg0, %arg1, %c0_i32 : i32, i32, i32
  }
  func.func @transform_1(%arg0: i32, %arg1: i32) -> (i32, i32) {
    %c0_i32 = arith.constant 0 : i32
    %c0_i32_0 = arith.constant 0 : i32
    %c0_i32_1 = arith.constant 0 : i32
    return %c0_i32, %c0_i32_0 : i32, i32
  }
  func.func @transform_2(%arg0: i32, %arg1: i32) -> (i32, i32) {
    %c0_i32 = arith.constant 0 : i32
    %c0_i32_0 = arith.constant 0 : i32
    return %arg0, %c0_i32 : i32, i32
  }
  func.func @transform_3(%arg0: i32, %arg1: i32) -> (i32, i32) {
    %c0_i32 = arith.constant 0 : i32
    %c0_i32_0 = arith.constant 0 : i32
    %c0_i32_1 = arith.constant 0 : i32
    return %c0_i32, %c0_i32_0 : i32, i32
  }
  func.func @transform_4(%arg0: i32, %arg1: i32) -> (i32, i32) {
    %c0_i32 = arith.constant 0 : i32
    return %arg0, %arg1 : i32, i32
  }
}

</mosaic_0001>

<llo_original>
// kernel: score_model_forward.1
$region0: #{score_model_forward.1}
  #allocation0 [shape = 'u32[]', space=smem, size = 0x4, offset = 0x4, fixed_abs, tag = 'smem constant byte address 0x4 - core index']
  #allocation1 [shape = 'u32[144,128]{1,0:T(1,128)}', space=vmem, size = 0x12000, scoped, tag = 'internal scratch']
  %s0 = inlined_call_operand.vmem [shape: f32[2,8,32], index: 0, kind: input, shape index: {}]
  %s1 = inlined_call_operand.vmem [shape: f32[32,32], index: 1, kind: input, shape index: {}]
  %s2 = inlined_call_operand.vmem [shape: f32[2,32], index: 2, kind: input, shape index: {}]
  %s3 = inlined_call_operand.vmem [shape: f32[1,32], index: 3, kind: input, shape index: {}]
  %s4 = inlined_call_operand.hbm [shape: f32[2,8], index: 4, kind: output, shape index: {}]
  %s5 = sld [smem:[#allocation0]]
  $region26: #{score_model_forward.1} parent=0
    _
  %s7 = ssub.s32 1, %s5
  %s8 = scalar_select 0, %s7, %s5
  $region1: #{score_model_forward.1} parent=0
    #allocation2 [shape = 'u8[1024]{0}', space=vmem, size = 0x400, scoped, tag = 'output window, operand 0, single buffered']
    #allocation3 [shape = 's32[1]{0}', space=sflag, size = 0x4, scoped, tag = 'scoped memory for score_model_forward.1']
    %9 = vsyncpa [#allocation3], 0
    // Predicated region
    $region2: #{score_model_forward.1} parent=1 // pred_check
      _
    $region3: #{score_model_forward.1} parent=1 // pred_check_branch
      %11 = sbr.rel (0) target = $region5
    $region4: #{score_model_forward.1} parent=1 // pred_region
      _
    $region5: #{score_model_forward.1} parent=1 // pred_fallthru
      _
    // Predicated region
    $region6: #{score_model_forward.1} parent=1 // pred_check
      _
    $region7: #{score_model_forward.1} parent=1 // pred_check_branch
      %13 = sbr.rel (0) target = $region9
    $region8: #{score_model_forward.1} parent=1 // pred_region
      _
    $region9: #{score_model_forward.1} parent=1 // pred_fallthru
      _
    // Predicated region
    $region10: #{score_model_forward.1} parent=1 // pred_check
      _
    $region11: #{score_model_forward.1} parent=1 // pred_check_branch
      %15 = sbr.rel (0) target = $region13
    $region12: #{score_model_forward.1} parent=1 // pred_region
      _
    $region13: #{score_model_forward.1} parent=1 // pred_fallthru
      _
    // Predicated region
    $region14: #{score_model_forward.1} parent=1 // pred_check
      _
    $region15: #{score_model_forward.1} parent=1 // pred_check_branch
      %17 = sbr.rel (0) target = $region17
    $region16: #{score_model_forward.1} parent=1 // pred_region
      _
    $region17: #{score_model_forward.1} parent=1 // pred_fallthru
      _
    %v18 = vld [vmem:[%s0] sm:$0xff]
    %v19 = vld [vmem:[%s0 + $0x8] sm:$0xff]
    %v20 = vld [vmem:[%s1] sm:$0xff]
    %v21 = vld [vmem:[%s1 + $0x8] sm:$0xff]
    %v22 = vld [vmem:[%s1 + $0x10] sm:$0xff]
    %v23 = vld [vmem:[%s1 + $0x18] sm:$0xff]
    %vm24 = vcmask 261120
    %v26 = vsel %vm24, %v18, 0
    %v29 = vsel %vm24, %v19, 0
    %31 = vmatprep.subr.mxu0 0.0
    %v32 = vand.u32 %v20, 4294901760
    %33 = vmatpush1.msra.mxu0 %v32
    %34 = vmatprep.subr.mxu0 0.0
    %v35 = vand.u32 %v21, 4294901760
    %36 = vmatpush1.msra.mxu0 %v35
    %37 = vmatprep.subr.mxu0 0.0
    %v38 = vand.u32 %v22, 4294901760
    %39 = vmatpush1.msra.mxu0 %v38
    %40 = vmatprep.subr.mxu0 0.0
    %v41 = vand.u32 %v23, 4294901760
    %42 = vmatpush1.msra.mxu0 %v41
    %43 = vmatprep.subr.mxu0 0.0
    %44 = vmatpush1.msra.mxu0 0.0
    %45 = vmatprep.subr.mxu0 0.0
    %46 = vmatpush1.msra.mxu0 0.0
    %47 = vmatprep.subr.mxu0 0.0
    %48 = vmatpush1.msra.mxu0 0.0
    %49 = vmatprep.subr.mxu0 0.0
    %50 = vmatpush1.msra.mxu0 0.0
    %51 = vmatprep.subr.mxu0 0.0
    %52 = vmatpush1.msra.mxu0 0.0
    %53 = vmatprep.subr.mxu0 0.0
    %54 = vmatpush1.msra.mxu0 0.0
    %55 = vmatprep.subr.mxu0 0.0
    %56 = vmatpush1.msra.mxu0 0.0
    %57 = vmatprep.subr.mxu0 0.0
    %58 = vmatpush1.msra.mxu0 0.0
    %59 = vmatprep.subr.mxu0 0.0
    %60 = vmatpush1.msra.mxu0 0.0
    %61 = vmatprep.subr.mxu0 0.0
    %62 = vmatpush1.msra.mxu0 0.0
    %63 = vmatprep.subr.mxu0 0.0
    %64 = vmatpush1.msra.mxu0 0.0
    %65 = vmatprep.subr.mxu0 0.0
    %66 = vmatpush1.msra.mxu0 0.0
    %67 = vmatprep.subr.mxu0 0.0
    %68 = vmatpush1.msra.mxu0 0.0
    %69 = vmatprep.subr.mxu0 0.0
    %70 = vmatpush1.msra.mxu0 0.0
    %71 = vmatprep.subr.mxu0 0.0
    %72 = vmatpush1.msra.mxu0 0.0
    %73 = vmatprep.subr.mxu0 0.0
    %74 = vmatpush1.msra.mxu0 0.0
    %75 = vmatprep.subr.mxu0 0.0
    %76 = vmatpush1.msra.mxu0 0.0
    %77 = vmatprep.subr.mxu0 0.0
    %78 = vmatpush1.msra.mxu0 0.0
    %79 = vmatprep.subr.mxu0 0.0
    %80 = vmatpush1.msra.mxu0 0.0
    %81 = vmatprep.subr.mxu0 0.0
    %82 = vmatpush1.msra.mxu0 0.0
    %83 = vmatprep.subr.mxu0 0.0
    %84 = vmatpush1.msra.mxu0 0.0
    %85 = vmatprep.subr.mxu0 0.0
    %86 = vmatpush1.msra.mxu0 0.0
    %87 = vmatprep.subr.mxu0 0.0
    %88 = vmatpush1.msra.mxu0 0.0
    %89 = vmatprep.subr.mxu0 0.0
    %90 = vmatpush1.msra.mxu0 0.0
    %91 = vmatprep.subr.mxu0 0.0
    %92 = vmatpush1.msra.mxu0 0.0
    %93 = vmatprep.subr.mxu0 0.0
    %94 = vmatpush1.msra.mxu0 0.0
    %95 = vmatprep.subr.mxu0 0.0
    %96 = vmatpush1.msra.mxu0 0.0
    %97 = vmatprep.subr.mxu0 0.0
    %98 = vmatpush1.msra.mxu0 0.0
    %99 = vmatprep.mubr.f32.mxu0 0.0
    %v100 = vand.u32 %v26, 4294901760
    %v101 = vsub.f32 %v26, %v100
    %v102 = vand.u32 %v101, 4294901760
    %v103 = vsub.f32 %v101, %v102
    %v104 = vand.u32 %v103, 4294901760
    %105 = vmatmul.mubr.f32.gmra.mrb[0].mxu0 %v104
    %v106 = vpop.f32.mrb[0].mxu0
    %v107 = vadd.f32 0.0, %v106
    %v108 = vpop.f32.mrb[0].mxu0
    %109 = vmatprep.mubr.f32.mxu0 0.0
    %v110 = vand.u32 %v29, 4294901760
    %v111 = vsub.f32 %v29, %v110
    %v112 = vand.u32 %v111, 4294901760
    %v113 = vsub.f32 %v111, %v112
    %v114 = vand.u32 %v113, 4294901760
    %115 = vmatmul.mubr.f32.gmra.mrb[0].mxu0 %v114
    %v116 = vpop.f32.mrb[0].mxu0
    %v117 = vadd.f32 0.0, %v116
    %v118 = vpop.f32.mrb[0].mxu0
    %119 = vdwg.mxu0
    %120 = vmatprep.subr.mxu0 0.0
    %v121 = vand.u32 %v20, 4294901760
    %v122 = vsub.f32 %v20, %v121
    %v123 = vand.u32 %v122, 4294901760
    %v124 = vsub.f32 %v122, %v123
    %v125 = vand.u32 %v124, 4294901760
    %126 = vmatpush1.msra.mxu0 %v125
    %127 = vmatprep.subr.mxu0 0.0
    %v128 = vand.u32 %v21, 4294901760
    %v129 = vsub.f32 %v21, %v128
    %v130 = vand.u32 %v129, 4294901760
    %v131 = vsub.f32 %v129, %v130
    %v132 = vand.u32 %v131, 4294901760
    %133 = vmatpush1.msra.mxu0 %v132
    %134 = vmatprep.subr.mxu0 0.0
    %v135 = vand.u32 %v22, 4294901760
    %v136 = vsub.f32 %v22, %v135
    %v137 = vand.u32 %v136, 4294901760
    %v138 = vsub.f32 %v136, %v137
    %v139 = vand.u32 %v138, 4294901760
    %140 = vmatpush1.msra.mxu0 %v139
    %141 = vmatprep.subr.mxu0 0.0
    %v142 = vand.u32 %v23, 4294901760
    %v143 = vsub.f32 %v23, %v142
    %v144 = vand.u32 %v143, 4294901760
    %v145 = vsub.f32 %v143, %v144
    %v146 = vand.u32 %v145, 4294901760
    %147 = vmatpush1.msra.mxu0 %v146
    %148 = vmatprep.subr.mxu0 0.0
    %149 = vmatpush1.msra.mxu0 0.0
    %150 = vmatprep.subr.mxu0 0.0
    %151 = vmatpush1.msra.mxu0 0.0
    %152 = vmatprep.subr.mxu0 0.0
    %153 = vmatpush1.msra.mxu0 0.0
    %154 = vmatprep.subr.mxu0 0.0
    %155 = vmatpush1.msra.mxu0 0.0
    %156 = vmatprep.subr.mxu0 0.0
    %157 = vmatpush1.msra.mxu0 0.0
    %158 = vmatprep.subr.mxu0 0.0
    %159 = vmatpush1.msra.mxu0 0.0
    %160 = vmatprep.subr.mxu0 0.0
    %161 = vmatpush1.msra.mxu0 0.0
    %162 = vmatprep.subr.mxu0 0.0
    %163 = vmatpush1.msra.mxu0 0.0
    %164 = vmatprep.subr.mxu0 0.0
    %165 = vmatpush1.msra.mxu0 0.0
    %166 = vmatprep.subr.mxu0 0.0
    %167 = vmatpush1.msra.mxu0 0.0
    %168 = vmatprep.subr.mxu0 0.0
    %169 = vmatpush1.msra.mxu0 0.0
    %170 = vmatprep.subr.mxu0 0.0
    %171 = vmatpush1.msra.mxu0 0.0
    %172 = vmatprep.subr.mxu0 0.0
    %173 = vmatpush1.msra.mxu0 0.0
    %174 = vmatprep.subr.mxu0 0.0
    %175 = vmatpush1.msra.mxu0 0.0
    %176 = vmatprep.subr.mxu0 0.0
    %177 = vmatpush1.msra.mxu0 0.0
    %178 = vmatprep.subr.mxu0 0.0
    %179 = vmatpush1.msra.mxu0 0.0
    %180 = vmatprep.subr.mxu0 0.0
    %181 = vmatpush1.msra.mxu0 0.0
    %182 = vmatprep.subr.mxu0 0.0
    %183 = vmatpush1.msra.mxu0 0.0
    %184 = vmatprep.subr.mxu0 0.0
    %185 = vmatpush1.msra.mxu0 0.0
    %186 = vmatprep.subr.mxu0 0.0
    %187 = vmatpush1.msra.mxu0 0.0
    %188 = vmatprep.subr.mxu0 0.0
    %189 = vmatpush1.msra.mxu0 0.0
    %190 = vmatprep.subr.mxu0 0.0
    %191 = vmatpush1.msra.mxu0 0.0
    %192 = vmatprep.subr.mxu0 0.0
    %193 = vmatpush1.msra.mxu0 0.0
    %194 = vmatprep.subr.mxu0 0.0
    %195 = vmatpush1.msra.mxu0 0.0
    %196 = vmatprep.subr.mxu0 0.0
    %197 = vmatpush1.msra.mxu0 0.0
    %198 = vmatprep.subr.mxu0 0.0
    %199 = vmatpush1.msra.mxu0 0.0
    %200 = vmatprep.subr.mxu0 0.0
    %201 = vmatpush1.msra.mxu0 0.0
    %202 = vmatprep.subr.mxu0 0.0
    %203 = vmatpush1.msra.mxu0 0.0
    %204 = vmatprep.mubr.f32.mxu0 0.0
    %v205 = vand.u32 %v26, 4294901760
    %206 = vmatmul.mubr.f32.gmra.mrb[0].mxu0 %v205
    %v207 = vpop.f32.mrb[0].mxu0
    %v208 = vadd.f32 %v107, %v207
    %v209 = vpop.f32.mrb[0].mxu0
    %210 = vmatprep.mubr.f32.mxu0 0.0
    %v211 = vand.u32 %v29, 4294901760
    %212 = vmatmul.mubr.f32.gmra.mrb[0].mxu0 %v211
    %v213 = vpop.f32.mrb[0].mxu0
    %v214 = vadd.f32 %v117, %v213
    %v215 = vpop.f32.mrb[0].mxu0
    %216 = vdwg.mxu0
    %217 = vmatprep.subr.mxu0 0.0
    %v218 = vand.u32 %v20, 4294901760
    %v219 = vsub.f32 %v20, %v218
    %220 = vmatpush1.msra.mxu0 %v219
    %221 = vmatprep.subr.mxu0 0.0
    %v222 = vand.u32 %v21, 4294901760
    %v223 = vsub.f32 %v21, %v222
    %224 = vmatpush1.msra.mxu0 %v223
    %225 = vmatprep.subr.mxu0 0.0
    %v226 = vand.u32 %v22, 4294901760
    %v227 = vsub.f32 %v22, %v226
    %228 = vmatpush1.msra.mxu0 %v227
    %229 = vmatprep.subr.mxu0 0.0
    %v230 = vand.u32 %v23, 4294901760
    %v231 = vsub.f32 %v23, %v230
    %232 = vmatpush1.msra.mxu0 %v231
    %233 = vmatprep.subr.mxu0 0.0
    %234 = vmatpush1.msra.mxu0 0.0
    %235 = vmatprep.subr.mxu0 0.0
    %236 = vmatpush1.msra.mxu0 0.0
    %237 = vmatprep.subr.mxu0 0.0
    %238 = vmatpush1.msra.mxu0 0.0
    %239 = vmatprep.subr.mxu0 0.0
    %240 = vmatpush1.msra.mxu0 0.0
    %241 = vmatprep.subr.mxu0 0.0
    %242 = vmatpush1.msra.mxu0 0.0
    %243 = vmatprep.subr.mxu0 0.0
    %244 = vmatpush1.msra.mxu0 0.0
    %245 = vmatprep.subr.mxu0 0.0
    %246 = vmatpush1.msra.mxu0 0.0
    %247 = vmatprep.subr.mxu0 0.0
    %248 = vmatpush1.msra.mxu0 0.0
    %249 = vmatprep.subr.mxu0 0.0
    %250 = vmatpush1.msra.mxu0 0.0
    %251 = vmatprep.subr.mxu0 0.0
    %252 = vmatpush1.msra.mxu0 0.0
    %253 = vmatprep.subr.mxu0 0.0
    %254 = vmatpush1.msra.mxu0 0.0
    %255 = vmatprep.subr.mxu0 0.0
    %256 = vmatpush1.msra.mxu0 0.0
    %257 = vmatprep.subr.mxu0 0.0
    %258 = vmatpush1.msra.mxu0 0.0
    %259 = vmatprep.subr.mxu0 0.0
    %260 = vmatpush1.msra.mxu0 0.0
    %261 = vmatprep.subr.mxu0 0.0
    %262 = vmatpush1.msra.mxu0 0.0
    %263 = vmatprep.subr.mxu0 0.0
    %264 = vmatpush1.msra.mxu0 0.0
    %265 = vmatprep.subr.mxu0 0.0
    %266 = vmatpush1.msra.mxu0 0.0
    %267 = vmatprep.subr.mxu0 0.0
    %268 = vmatpush1.msra.mxu0 0.0
    %269 = vmatprep.subr.mxu0 0.0
    %270 = vmatpush1.msra.mxu0 0.0
    %271 = vmatprep.subr.mxu0 0.0
    %272 = vmatpush1.msra.mxu0 0.0
    %273 = vmatprep.subr.mxu0 0.0
    %274 = vmatpush1.msra.mxu0 0.0
    %275 = vmatprep.subr.mxu0 0.0
    %276 = vmatpush1.msra.mxu0 0.0
    %277 = vmatprep.subr.mxu0 0.0
    %278 = vmatpush1.msra.mxu0 0.0
    %279 = vmatprep.subr.mxu0 0.0
    %280 = vmatpush1.msra.mxu0 0.0
    %281 = vmatprep.subr.mxu0 0.0
    %282 = vmatpush1.msra.mxu0 0.0
    %283 = vmatprep.subr.mxu0 0.0
    %284 = vmatpush1.msra.mxu0 0.0
    %285 = vmatprep.subr.mxu0 0.0
    %286 = vmatpush1.msra.mxu0 0.0
    %287 = vmatprep.subr.mxu0 0.0
    %288 = vmatpush1.msra.mxu0 0.0
    %289 = vmatprep.mubr.f32.mxu0 0.0
    %v290 = vand.u32 %v26, 4294901760
    %v291 = vsub.f32 %v26, %v290
    %292 = vmatmul.mubr.f32.gmra.mrb[0].mxu0 %v291
    %v293 = vpop.f32.mrb[0].mxu0
    %v294 = vadd.f32 %v208, %v293
    %v295 = vpop.f32.mrb[0].mxu0
    %296 = vmatprep.mubr.f32.mxu0 0.0
    %v297 = vand.u32 %v29, 4294901760
    %v298 = vsub.f32 %v29, %v297
    %299 = vmatmul.mubr.f32.gmra.mrb[0].mxu0 %v298
    %v300 = vpop.f32.mrb[0].mxu0
    %v301 = vadd.f32 %v214, %v300
    %v302 = vpop.f32.mrb[0].mxu0
    %303 = vdwg.mxu0
    %304 = vmatprep.subr.mxu0 0.0
    %v305 = vand.u32 %v20, 4294901760
    %306 = vmatpush1.msra.mxu0 %v305
    %307 = vmatprep.subr.mxu0 0.0
    %v308 = vand.u32 %v21, 4294901760
    %309 = vmatpush1.msra.mxu0 %v308
    %310 = vmatprep.subr.mxu0 0.0
    %v311 = vand.u32 %v22, 4294901760
    %312 = vmatpush1.msra.mxu0 %v311
    %313 = vmatprep.subr.mxu0 0.0
    %v314 = vand.u32 %v23, 4294901760
    %315 = vmatpush1.msra.mxu0 %v314
    %316 = vmatprep.subr.mxu0 0.0
    %317 = vmatpush1.msra.mxu0 0.0
    %318 = vmatprep.subr.mxu0 0.0
    %319 = vmatpush1.msra.mxu0 0.0
    %320 = vmatprep.subr.mxu0 0.0
    %321 = vmatpush1.msra.mxu0 0.0
    %322 = vmatprep.subr.mxu0 0.0
    %323 = vmatpush1.msra.mxu0 0.0
    %324 = vmatprep.subr.mxu0 0.0
    %325 = vmatpush1.msra.mxu0 0.0
    %326 = vmatprep.subr.mxu0 0.0
    %327 = vmatpush1.msra.mxu0 0.0
    %328 = vmatprep.subr.mxu0 0.0
    %329 = vmatpush1.msra.mxu0 0.0
    %330 = vmatprep.subr.mxu0 0.0
    %331 = vmatpush1.msra.mxu0 0.0
    %332 = vmatprep.subr.mxu0 0.0
    %333 = vmatpush1.msra.mxu0 0.0
    %334 = vmatprep.subr.mxu0 0.0
    %335 = vmatpush1.msra.mxu0 0.0
    %336 = vmatprep.subr.mxu0 0.0
    %337 = vmatpush1.msra.mxu0 0.0
    %338 = vmatprep.subr.mxu0 0.0
    %339 = vmatpush1.msra.mxu0 0.0
    %340 = vmatprep.subr.mxu0 0.0
    %341 = vmatpush1.msra.mxu0 0.0
    %342 = vmatprep.subr.mxu0 0.0
    %343 = vmatpush1.msra.mxu0 0.0
    %344 = vmatprep.subr.mxu0 0.0
    %345 = vmatpush1.msra.mxu0 0.0
    %346 = vmatprep.subr.mxu0 0.0
    %347 = vmatpush1.msra.mxu0 0.0
    %348 = vmatprep.subr.mxu0 0.0
    %349 = vmatpush1.msra.mxu0 0.0
    %350 = vmatprep.subr.mxu0 0.0
    %351 = vmatpush1.msra.mxu0 0.0
    %352 = vmatprep.subr.mxu0 0.0
    %353 = vmatpush1.msra.mxu0 0.0
    %354 = vmatprep.subr.mxu0 0.0
    %355 = vmatpush1.msra.mxu0 0.0
    %356 = vmatprep.subr.mxu0 0.0
    %357 = vmatpush1.msra.mxu0 0.0
    %358 = vmatprep.subr.mxu0 0.0
    %359 = vmatpush1.msra.mxu0 0.0
    %360 = vmatprep.subr.mxu0 0.0
    %361 = vmatpush1.msra.mxu0 0.0
    %362 = vmatprep.subr.mxu0 0.0
    %363 = vmatpush1.msra.mxu0 0.0
    %364 = vmatprep.subr.mxu0 0.0
    %365 = vmatpush1.msra.mxu0 0.0
    %366 = vmatprep.subr.mxu0 0.0
    %367 = vmatpush1.msra.mxu0 0.0
    %368 = vmatprep.subr.mxu0 0.0
    %369 = vmatpush1.msra.mxu0 0.0
    %370 = vmatprep.subr.mxu0 0.0
    %371 = vmatpush1.msra.mxu0 0.0
    %372 = vmatprep.mubr.f32.mxu0 0.0
    %v373 = vand.u32 %v26, 4294901760
    %v374 = vsub.f32 %v26, %v373
    %v375 = vand.u32 %v374, 4294901760
    %376 = vmatmul.mubr.f32.gmra.mrb[0].mxu0 %v375
    %v377 = vpop.f32.mrb[0].mxu0
    %v378 = vadd.f32 %v294, %v377
    %v379 = vpop.f32.mrb[0].mxu0
    %380 = vmatprep.mubr.f32.mxu0 0.0
    %v381 = vand.u32 %v29, 4294901760
    %v382 = vsub.f32 %v29, %v381
    %v383 = vand.u32 %v382, 4294901760
    %384 = vmatmul.mubr.f32.gmra.mrb[0].mxu0 %v383
    %v385 = vpop.f32.mrb[0].mxu0
    %v386 = vadd.f32 %v301, %v385
    %v387 = vpop.f32.mrb[0].mxu0
    %388 = vdwg.mxu0
    %389 = vmatprep.subr.mxu0 0.0
    %v390 = vand.u32 %v20, 4294901760
    %v391 = vsub.f32 %v20, %v390
    %v392 = vand.u32 %v391, 4294901760
    %393 = vmatpush1.msra.mxu0 %v392
    %394 = vmatprep.subr.mxu0 0.0
    %v395 = vand.u32 %v21, 4294901760
    %v396 = vsub.f32 %v21, %v395
    %v397 = vand.u32 %v396, 4294901760
    %398 = vmatpush1.msra.mxu0 %v397
    %399 = vmatprep.subr.mxu0 0.0
    %v400 = vand.u32 %v22, 4294901760
    %v401 = vsub.f32 %v22, %v400
    %v402 = vand.u32 %v401, 4294901760
    %403 = vmatpush1.msra.mxu0 %v402
    %404 = vmatprep.subr.mxu0 0.0
    %v405 = vand.u32 %v23, 4294901760
    %v406 = vsub.f32 %v23, %v405
    %v407 = vand.u32 %v406, 4294901760
    %408 = vmatpush1.msra.mxu0 %v407
    %409 = vmatprep.subr.mxu0 0.0
    %410 = vmatpush1.msra.mxu0 0.0
    %411 = vmatprep.subr.mxu0 0.0
    %412 = vmatpush1.msra.mxu0 0.0
    %413 = vmatprep.subr.mxu0 0.0
    %414 = vmatpush1.msra.mxu0 0.0
    %415 = vmatprep.subr.mxu0 0.0
    %416 = vmatpush1.msra.mxu0 0.0
    %417 = vmatprep.subr.mxu0 0.0
    %418 = vmatpush1.msra.mxu0 0.0
    %419 = vmatprep.subr.mxu0 0.0
    %420 = vmatpush1.msra.mxu0 0.0
    %421 = vmatprep.subr.mxu0 0.0
    %422 = vmatpush1.msra.mxu0 0.0
    %423 = vmatprep.subr.mxu0 0.0
    %424 = vmatpush1.msra.mxu0 0.0
    %425 = vmatprep.subr.mxu0 0.0
    %426 = vmatpush1.msra.mxu0 0.0
    %427 = vmatprep.subr.mxu0 0.0
    %428 = vmatpush1.msra.mxu0 0.0
    %429 = vmatprep.subr.mxu0 0.0
    %430 = vmatpush1.msra.mxu0 0.0
    %431 = vmatprep.subr.mxu0 0.0
    %432 = vmatpush1.msra.mxu0 0.0
    %433 = vmatprep.subr.mxu0 0.0
    %434 = vmatpush1.msra.mxu0 0.0
    %435 = vmatprep.subr.mxu0 0.0
    %436 = vmatpush1.msra.mxu0 0.0
    %437 = vmatprep.subr.mxu0 0.0
    %438 = vmatpush1.msra.mxu0 0.0
    %439 = vmatprep.subr.mxu0 0.0
    %440 = vmatpush1.msra.mxu0 0.0
    %441 = vmatprep.subr.mxu0 0.0
    %442 = vmatpush1.msra.mxu0 0.0
    %443 = vmatprep.subr.mxu0 0.0
    %444 = vmatpush1.msra.mxu0 0.0
    %445 = vmatprep.subr.mxu0 0.0
    %446 = vmatpush1.msra.mxu0 0.0
    %447 = vmatprep.subr.mxu0 0.0
    %448 = vmatpush1.msra.mxu0 0.0
    %449 = vmatprep.subr.mxu0 0.0
    %450 = vmatpush1.msra.mxu0 0.0
    %451 = vmatprep.subr.mxu0 0.0
    %452 = vmatpush1.msra.mxu0 0.0
    %453 = vmatprep.subr.mxu0 0.0
    %454 = vmatpush1.msra.mxu0 0.0
    %455 = vmatprep.subr.mxu0 0.0
    %456 = vmatpush1.msra.mxu0 0.0
    %457 = vmatprep.subr.mxu0 0.0
    %458 = vmatpush1.msra.mxu0 0.0
    %459 = vmatprep.subr.mxu0 0.0
    %460 = vmatpush1.msra.mxu0 0.0
    %461 = vmatprep.subr.mxu0 0.0
    %462 = vmatpush1.msra.mxu0 0.0
    %463 = vmatprep.subr.mxu0 0.0
    %464 = vmatpush1.msra.mxu0 0.0
    %465 = vmatprep.mubr.f32.mxu0 0.0
    %v466 = vand.u32 %v26, 4294901760
    %467 = vmatmul.mubr.f32.gmra.mrb[0].mxu0 %v466
    %v468 = vpop.f32.mrb[0].mxu0
    %v469 = vadd.f32 %v378, %v468
    %v470 = vpop.f32.mrb[0].mxu0
    %471 = vmatprep.mubr.f32.mxu0 0.0
    %v472 = vand.u32 %v29, 4294901760
    %473 = vmatmul.mubr.f32.gmra.mrb[0].mxu0 %v472
    %v474 = vpop.f32.mrb[0].mxu0
    %v475 = vadd.f32 %v386, %v474
    %v476 = vpop.f32.mrb[0].mxu0
    %477 = vdwg.mxu0
    %478 = vmatprep.subr.mxu0 0.0
    %v479 = vand.u32 %v20, 4294901760
    %480 = vmatpush1.msra.mxu0 %v479
    %481 = vmatprep.subr.mxu0 0.0
    %v482 = vand.u32 %v21, 4294901760
    %483 = vmatpush1.msra.mxu0 %v482
    %484 = vmatprep.subr.mxu0 0.0
    %v485 = vand.u32 %v22, 4294901760
    %486 = vmatpush1.msra.mxu0 %v485
    %487 = vmatprep.subr.mxu0 0.0
    %v488 = vand.u32 %v23, 4294901760
    %489 = vmatpush1.msra.mxu0 %v488
    %490 = vmatprep.subr.mxu0 0.0
    %491 = vmatpush1.msra.mxu0 0.0
    %492 = vmatprep.subr.mxu0 0.0
    %493 = vmatpush1.msra.mxu0 0.0
    %494 = vmatprep.subr.mxu0 0.0
    %495 = vmatpush1.msra.mxu0 0.0
    %496 = vmatprep.subr.mxu0 0.0
    %497 = vmatpush1.msra.mxu0 0.0
    %498 = vmatprep.subr.mxu0 0.0
    %499 = vmatpush1.msra.mxu0 0.0
    %500 = vmatprep.subr.mxu0 0.0
    %501 = vmatpush1.msra.mxu0 0.0
    %502 = vmatprep.subr.mxu0 0.0
    %503 = vmatpush1.msra.mxu0 0.0
    %504 = vmatprep.subr.mxu0 0.0
    %505 = vmatpush1.msra.mxu0 0.0
    %506 = vmatprep.subr.mxu0 0.0
    %507 = vmatpush1.msra.mxu0 0.0
    %508 = vmatprep.subr.mxu0 0.0
    %509 = vmatpush1.msra.mxu0 0.0
    %510 = vmatprep.subr.mxu0 0.0
    %511 = vmatpush1.msra.mxu0 0.0
    %512 = vmatprep.subr.mxu0 0.0
    %513 = vmatpush1.msra.mxu0 0.0
    %514 = vmatprep.subr.mxu0 0.0
    %515 = vmatpush1.msra.mxu0 0.0
    %516 = vmatprep.subr.mxu0 0.0
    %517 = vmatpush1.msra.mxu0 0.0
    %518 = vmatprep.subr.mxu0 0.0
    %519 = vmatpush1.msra.mxu0 0.0
    %520 = vmatprep.subr.mxu0 0.0
    %521 = vmatpush1.msra.mxu0 0.0
    %522 = vmatprep.subr.mxu0 0.0
    %523 = vmatpush1.msra.mxu0 0.0
    %524 = vmatprep.subr.mxu0 0.0
    %525 = vmatpush1.msra.mxu0 0.0
    %526 = vmatprep.subr.mxu0 0.0
    %527 = vmatpush1.msra.mxu0 0.0
    %528 = vmatprep.subr.mxu0 0.0
    %529 = vmatpush1.msra.mxu0 0.0
    %530 = vmatprep.subr.mxu0 0.0
    %531 = vmatpush1.msra.mxu0 0.0
    %532 = vmatprep.subr.mxu0 0.0
    %533 = vmatpush1.msra.mxu0 0.0
    %534 = vmatprep.subr.mxu0 0.0
    %535 = vmatpush1.msra.mxu0 0.0
    %536 = vmatprep.subr.mxu0 0.0
    %537 = vmatpush1.msra.mxu0 0.0
    %538 = vmatprep.subr.mxu0 0.0
    %539 = vmatpush1.msra.mxu0 0.0
    %540 = vmatprep.subr.mxu0 0.0
    %541 = vmatpush1.msra.mxu0 0.0
    %542 = vmatprep.subr.mxu0 0.0
    %543 = vmatpush1.msra.mxu0 0.0
    %544 = vmatprep.subr.mxu0 0.0
    %545 = vmatpush1.msra.mxu0 0.0
    %546 = vmatprep.mubr.f32.mxu0 0.0
    %v547 = vand.u32 %v26, 4294901760
    %548 = vmatmul.mubr.f32.gmra.mrb[0].mxu0 %v547
    %v549 = vpop.f32.mrb[0].mxu0
    %v550 = vadd.f32 %v469, %v549
    %v551 = vpop.f32.mrb[0].mxu0
    %552 = vmatprep.mubr.f32.mxu0 0.0
    %v553 = vand.u32 %v29, 4294901760
    %554 = vmatmul.mubr.f32.gmra.mrb[0].mxu0 %v553
    %v555 = vpop.f32.mrb[0].mxu0
    %v556 = vadd.f32 %v475, %v555
    %v557 = vpop.f32.mrb[0].mxu0
    %558 = vdwg.mxu0
    %v559 = vld [vmem:[%s2] sm:$0x3]
    %v562 = vunpack.c.l.s4 1966171168
    %v563 = vunpack.c.0.s8 %v562
    %v564 = vlaneseq
    %v565 = vshrl.u32 %v564, 7
    %v566 = vsub.s32 %v563, %v565
    %v567 = vrot.slane %v559, %v566
    %v568 = vcombine.high %v567, %v567
    %v570 = vunpack.c.l.s4 1966171168
    %v571 = vunpack.c.0.s8 %v570
    %v572 = vlaneseq
    %v573 = vshrl.u32 %v572, 7
    %v574 = vsub.s32 %v571, %v573
    %v575 = vrot.slane %v567, %v574
    %v577 = vunpack.c.l.s4 1966171168
    %v578 = vunpack.c.0.s8 %v577
    %v579 = vlaneseq
    %v580 = vshrl.u32 %v579, 7
    %v581 = vsub.s32 %v578, %v580
    %v582 = vrot.slane %v568, %v581
    %v583 = vlaneseq
    %v584 = vshrl.u32 %v583, 7
    %v585 = vsub.s32 0, %v584
    %v586 = vrot.slane %v575, %v585
    %v587 = vlaneseq
    %v588 = vshrl.u32 %v587, 7
    %v589 = vsub.s32 0, %v588
    %v590 = vrot.slane %v582, %v589
    %v593 = vadd.f32 %v550, %v586
    %v594 = vadd.f32 %v556, %v590
    %v595 = vmul.f32 %v593, 0.01
    %v596 = vmul.f32 %v594, 0.01
    %v597 = vmax.f32 %v593, %v595
    %v598 = vmax.f32 %v594, %v596
    %v599 = vld [vmem:[%s3] sm:$0x1]
    %v601 = vlaneseq
    %v602 = vshrl.u32 %v601, 7
    %v603 = vsub.s32 0, %v602
    %v604 = vrot.slane %v599, %v603
    %v606 = vmul.f32 %v597, %v604
    %v607 = vmul.f32 %v598, %v604
    %v608 = vsel %vm24, %v606, 0.0
    %609 = vadd.xlane.f32.xlu0 %v608
    %v610 = vpop.xlane.xlu0 %609
    %v611 = vsel %vm24, %v607, 0.0
    %612 = vadd.xlane.f32.xlu0 %v611
    %v613 = vpop.xlane.xlu0 %612
    %v616 = vlaneseq
    %v617 = vand.u32 %v616, 127
    %v618 = vlaneseq
    %v619 = vshrl.u32 %v618, 7
    %v620 = vsub.s32 %v617, %v619
    %v621 = vrot.slane %v610, %v620
    %v622 = vlaneseq
    %v623 = vshrl.u32 %v622, 7
    %v624 = vsub.s32 %v617, %v623
    %v625 = vrot.slane %v613, %v624
    %vm626 = vcmask 1041409
    %v627 = vsel %vm626, %v625, %v621
    %vm629 = vcmask 58368
    %630 = vst.msk [vmem:[#allocation2] sm:$0x3] %vm629, %v627
    // Predicated region
    $region18: #{score_model_forward.1} parent=1 // pred_check
      _
    $region19: #{score_model_forward.1} parent=1 // pred_check_branch
      %632 = sbr.rel (0) target = $region21
    $region20: #{score_model_forward.1} parent=1 // pred_region
      %s634 = ssub.s32 32, 32
      %635 = vsyncadd [#allocation3], %s634
      %s637 = sshll.u32 [#allocation2], 4
      %s638 = int_to_ptr.vmem [resolvable:$true] %s637
      %640 = dma.vmem_to_hbm [thread:$0]  %s638, 32, %s4, [#allocation3]
    $region21: #{score_model_forward.1} parent=1 // pred_fallthru
      _
    // Predicated region
    $region22: #{score_model_forward.1} parent=1 // pred_check
      _
    $region23: #{score_model_forward.1} parent=1 // pred_check_branch
      %642 = sbr.rel (0) target = $region25
    $region24: #{score_model_forward.1} parent=1 // pred_region
      %643 = dma.done [#allocation3], 32
    $region25: #{score_model_forward.1} parent=1 // pred_fallthru
      _
    %644 = vsyncpa [#allocation3], 1

</llo_original>
